<compile_context>
chip_gen: v7x
topology: tpu7x:2x2x1
jax: 0.10.0
libtpu: 0.0.40
codegen_flags: <defaults>
</compile_context>

<pallas_src>
import math

import jax
import jax.numpy as jnp
import numpy as np
from jax.experimental import pallas as pl
from jax.experimental.pallas import tpu as pltpu

_MASK_VALUE = -1.0e30   # finite, so fully-masked rows give a uniform softmax
_TQ_PREF = 256          # preferred query-block rows
_TK_PREF = 512          # preferred key-block rows
_LANE = 128


def _round_up(x, m):
    return (x + m - 1) // m * m


def _make_flash_kernel(per_query, scale, k_actual, k_padded, tk):
    """Build the flash-attention kernel body.

    per_query: if True, vl_ref is a (1, tq, 1) int32 VMEM block (per-query
               lens); otherwise it is the (B,) int32 SMEM scalar-prefetch ref.
    """

    def kernel(vl_ref, q_ref, k_ref, v_ref, o_ref, m_sc, l_sc, acc_sc):
        kb = pl.program_id(2)

        @pl.when(kb == 0)
        def _init():
            m_sc[...] = jnp.full_like(m_sc, -jnp.inf)
            l_sc[...] = jnp.zeros_like(l_sc)
            acc_sc[...] = jnp.zeros_like(acc_sc)

        q = q_ref[0]                                # (tq, D)  native dtype
        k = k_ref[0]                                # (tk, D)
        v = v_ref[0]                                # (tk, Dvp)

        # Fold 1/sqrt(d) into Q (cheaper than scaling the (tq, tk) scores).
        qs = q * jnp.asarray(scale, q.dtype)

        # Q @ K^T on the MXU, f32 accumulation (no operand up-cast).
        s = jax.lax.dot_general(
            qs, k, (((1,), (1,)), ((), ())),
            preferred_element_type=jnp.float32)     # (tq, tk) f32

        # Masked softmax mask: key position >= valid_len -> large negative.
        col = jax.lax.broadcasted_iota(jnp.int32, s.shape, 1) + kb * tk
        if per_query:
            thr = vl_ref[0]                         # (tq, 1) int32
        else:
            thr = vl_ref[pl.program_id(0)]          # scalar int32 from SMEM
        s = jnp.where(col < thr, s, jnp.float32(_MASK_VALUE))
        if k_padded != k_actual:                    # static: only if K padded
            s = jnp.where(col < k_actual, s, jnp.float32(-jnp.inf))

        # Online softmax update.
        m_prev = m_sc[...]
        m_new = jnp.maximum(m_prev, jnp.max(s, axis=-1, keepdims=True))
        alpha = jnp.exp(m_prev - m_new)
        p = jnp.exp(s - m_new)
        l_sc[...] = alpha * l_sc[...] + jnp.sum(p, axis=-1, keepdims=True)
        acc_sc[...] = alpha * acc_sc[...] + jax.lax.dot_general(
            p.astype(v.dtype), v, (((1,), (0,)), ((), ())),
            preferred_element_type=jnp.float32)
        m_sc[...] = m_new

        @pl.when(kb == pl.num_programs(2) - 1)
        def _finalize():
            inv_l = pl.reciprocal(l_sc[...], approx=True)   # EUP slot
            o_ref[0] = (acc_sc[...] * inv_l).astype(o_ref.dtype)

    return kernel


def dot_product_attention(queries, keys, values, valid_lens=None,
                          *, tq=None, tk=None):
    queries = jnp.asarray(queries)
    keys = jnp.asarray(keys)
    values = jnp.asarray(values)

    B, Q, D = queries.shape
    Bk, K, Dk = keys.shape
    Bv, Kv, Dv = values.shape
    assert B == Bk == Bv and D == Dk and K == Kv

    scale = 1.0 / math.sqrt(D)

    # Tile sizes: multiples of 8 sublanes, capped at the preferred size; the
    # sequence dims are zero-padded up to a whole number of tiles.
    tq = tq or min(_TQ_PREF, _round_up(Q, 8))
    tk = tk or min(_TK_PREF, _round_up(K, 8))
    tq = _round_up(tq, 8)
    tk = _round_up(tk, 8)
    Qp = _round_up(Q, tq)
    Kp = _round_up(K, tk)
    Dvp = _round_up(Dv, _LANE)   # lane-dense output stores

    qp = queries
    if Qp != Q:
        qp = jnp.pad(qp, ((0, 0), (0, Qp - Q), (0, 0)))
    kp, vp = keys, values
    if Kp != K:
        kp = jnp.pad(kp, ((0, 0), (0, Kp - K), (0, 0)))
        vp = jnp.pad(vp, ((0, 0), (0, Kp - K), (0, 0)))
    if Dvp != Dv:
        vp = jnp.pad(vp, ((0, 0), (0, 0), (0, Dvp - Dv)))

    per_query = valid_lens is not None and jnp.asarray(valid_lens).ndim == 2

    grid = (B, Qp // tq, Kp // tk)
    scratch_shapes = [
        pltpu.VMEM((tq, 1), jnp.float32),     # running max m
        pltpu.VMEM((tq, 1), jnp.float32),     # running sum l
        pltpu.VMEM((tq, Dvp), jnp.float32),   # output accumulator
    ]
    kernel = _make_flash_kernel(per_query, scale, K, Kp, tk)
    out_shape = jax.ShapeDtypeStruct((B, Qp, Dvp), queries.dtype)
    compiler_params = pltpu.CompilerParams(
        dimension_semantics=("parallel", "parallel", "arbitrary"))

    if per_query:
        # Per-(batch, query) lengths: small lane/sublane column in VMEM.
        vl = jnp.asarray(valid_lens).astype(jnp.int32)          # (B, Q)
        if Qp != Q:
            vl = jnp.pad(vl, ((0, 0), (0, Qp - Q)))
        vl = vl[:, :, None]                                     # (B, Qp, 1)
        grid_spec = pltpu.PrefetchScalarGridSpec(
            num_scalar_prefetch=0,
            grid=grid,
            in_specs=[
                pl.BlockSpec((1, tq, 1), lambda b, qi, ki: (b, qi, 0)),
                pl.BlockSpec((1, tq, D), lambda b, qi, ki: (b, qi, 0)),
                pl.BlockSpec((1, tk, D), lambda b, qi, ki: (b, ki, 0)),
                pl.BlockSpec((1, tk, Dvp), lambda b, qi, ki: (b, ki, 0)),
            ],
            out_specs=pl.BlockSpec((1, tq, Dvp), lambda b, qi, ki: (b, qi, 0)),
            scratch_shapes=scratch_shapes,
        )
        out = pl.pallas_call(
            kernel, out_shape=out_shape, grid_spec=grid_spec,
            compiler_params=compiler_params)(vl, qp, kp, vp)
    else:
        # Per-batch lengths (or None): scalar prefetch into SMEM.
        if valid_lens is None:
            vl = jnp.full((B,), K, dtype=jnp.int32)
        else:
            vl = jnp.asarray(valid_lens).astype(jnp.int32).reshape(B)
        grid_spec = pltpu.PrefetchScalarGridSpec(
            num_scalar_prefetch=1,
            grid=grid,
            in_specs=[
                pl.BlockSpec((1, tq, D), lambda b, qi, ki, vl_ref: (b, qi, 0)),
                pl.BlockSpec((1, tk, D), lambda b, qi, ki, vl_ref: (b, ki, 0)),
                pl.BlockSpec((1, tk, Dvp), lambda b, qi, ki, vl_ref: (b, ki, 0)),
            ],
            out_specs=pl.BlockSpec((1, tq, Dvp),
                                   lambda b, qi, ki, vl_ref: (b, qi, 0)),
            scratch_shapes=scratch_shapes,
        )
        out = pl.pallas_call(
            kernel, out_shape=out_shape, grid_spec=grid_spec,
            compiler_params=compiler_params)(vl, qp, kp, vp)

    return out[:, :Q, :Dv]


class DotProductAttention:
    """Scaled dot-product attention, forward-only (dropout p=0 -> identity)."""

    def __init__(self, dropout: float = 0.0):
        self.dropout = dropout  # identity at inference

    def __call__(self, queries, keys, values, valid_lens=None):
        return dot_product_attention(queries, keys, values, valid_lens)


def _reference(queries, keys, values, valid_lens):
    """Pure-JAX reference replicating the PyTorch semantics."""
    d = queries.shape[-1]
    scores = jnp.einsum("bqd,bkd->bqk", queries, keys) / math.sqrt(d)
    B, Q, K = scores.shape
    if valid_lens is None:
        masked = scores
    else:
        vl = jnp.asarray(valid_lens)
        if vl.ndim == 1:
            vl = jnp.broadcast_to(vl[:, None], (B, Q))
        col = jnp.arange(K)[None, None, :]
        masked = jnp.where(col < vl[:, :, None], scores, -1.0e6)
    w = jax.nn.softmax(masked, axis=-1)
    return jnp.einsum("bqk,bkv->bqv", w, values)


if __name__ == "__main__":
    key = jax.random.PRNGKey(0)
    kq, kk, kv = jax.random.split(key, 3)

    B, Q, K, D, Dv = 2, 8, 8, 16, 16
    queries = jax.random.normal(kq, (B, Q, D), dtype=jnp.float32)
    keys = jax.random.normal(kk, (B, K, D), dtype=jnp.float32)
    values = jax.random.normal(kv, (B, K, Dv), dtype=jnp.float32)

    attn = DotProductAttention(dropout=0.0)

    # 1-D per-batch valid lens (SMEM scalar-prefetch path).
    valid_lens_1d = jnp.array([3, 6], dtype=jnp.int32)
    out = jax.block_until_ready(attn(queries, keys, values, valid_lens_1d))
    ref = jax.block_until_ready(_reference(queries, keys, values, valid_lens_1d))
    np.testing.assert_allclose(np.asarray(out), np.asarray(ref),
                               rtol=3e-3, atol=3e-3)

    # No mask.
    out = jax.block_until_ready(attn(queries, keys, values, None))
    ref = jax.block_until_ready(_reference(queries, keys, values, None))
    np.testing.assert_allclose(np.asarray(out), np.asarray(ref),
                               rtol=3e-3, atol=3e-3)

    # 2-D per-query valid lens (VMEM column path).
    valid_lens_2d = jnp.array([[1, 2, 3, 4, 5, 6, 7, 8],
                               [8, 7, 6, 5, 4, 3, 2, 1]], dtype=jnp.int32)
    out = jax.block_until_ready(attn(queries, keys, values, valid_lens_2d))
    ref = jax.block_until_ready(_reference(queries, keys, values, valid_lens_2d))
    np.testing.assert_allclose(np.asarray(out), np.asarray(ref),
                               rtol=3e-3, atol=3e-3)

    print("KERNEL_OK")
</pallas_src>

<mosaic_0001>
module attributes {stable_mosaic.version = 11 : i64} {
  func.func @kernel(%arg0: i32, %arg1: i32, %arg2: i32, %arg3: memref<2xi32, #tpu.memory_space<smem>>, %arg4: memref<1x8x16xf32, #tpu.memory_space<vmem>>, %arg5: memref<1x8x16xf32, #tpu.memory_space<vmem>>, %arg6: memref<1x8x128xf32, #tpu.memory_space<vmem>>, %arg7: memref<1x8x128xf32, #tpu.memory_space<vmem>>, %arg8: memref<8x1xf32, #tpu.memory_space<vmem>>, %arg9: memref<8x1xf32, #tpu.memory_space<vmem>>, %arg10: memref<8x128xf32, #tpu.memory_space<vmem>>) attributes {dimension_semantics = [#tpu.dimension_semantics<parallel>, #tpu.dimension_semantics<parallel>, #tpu.dimension_semantics<arbitrary>], iteration_bounds = array<i64: 2, 1, 1>, scalar_prefetch = 1 : i64, scratch_operands = 3 : i64, tpu.core_type = #tpu.core_type<tc>, window_params = [{transform_indices = @transform_0, window_bounds = array<i64: 1, 8, 16>}, {transform_indices = @transform_1, window_bounds = array<i64: 1, 8, 16>}, {transform_indices = @transform_2, window_bounds = array<i64: 1, 8, 128>}, {transform_indices = @transform_3, window_bounds = array<i64: 1, 8, 128>}]} {
    %c0_i32 = arith.constant 0 : i32
    %0 = arith.cmpi eq, %arg2, %c0_i32 : i32
    %1 = arith.extui %0 : i1 to i32
    %c0_i32_0 = arith.constant 0 : i32
    %2 = arith.cmpi ne, %1, %c0_i32_0 : i32
    scf.if %2 {
      %cst_28 = arith.constant 0xFF800000 : f32
      %47 = vector.broadcast %cst_28 : f32 to vector<8x1xf32>
      %c0_29 = arith.constant 0 : index
      %c0_30 = arith.constant 0 : index
      %48 = vector.load %arg8[%c0_29, %c0_30] : memref<8x1xf32, #tpu.memory_space<vmem>>, vector<8x1xf32>
      tpu.vector_store %arg8[%c0_29, %c0_30], %47 {strides = array<i32>} : memref<8x1xf32, #tpu.memory_space<vmem>>, vector<8x1xf32>,
      %cst_31 = arith.constant 0.000000e+00 : f32
      %49 = vector.broadcast %cst_31 : f32 to vector<8x1xf32>
      %c0_32 = arith.constant 0 : index
      %c0_33 = arith.constant 0 : index
      %50 = vector.load %arg9[%c0_32, %c0_33] : memref<8x1xf32, #tpu.memory_space<vmem>>, vector<8x1xf32>
      tpu.vector_store %arg9[%c0_32, %c0_33], %49 {strides = array<i32>} : memref<8x1xf32, #tpu.memory_space<vmem>>, vector<8x1xf32>,
      %cst_34 = arith.constant 0.000000e+00 : f32
      %51 = vector.broadcast %cst_34 : f32 to vector<8x128xf32>
      %c0_35 = arith.constant 0 : index
      %c0_36 = arith.constant 0 : index
      %52 = vector.load %arg10[%c0_35, %c0_36] : memref<8x128xf32, #tpu.memory_space<vmem>>, vector<8x128xf32>
      tpu.vector_store %arg10[%c0_35, %c0_36], %51 {strides = array<i32>} : memref<8x128xf32, #tpu.memory_space<vmem>>, vector<8x128xf32>,
    } else {
    }
    %c0 = arith.constant 0 : index
    %c0_1 = arith.constant 0 : index
    %c0_2 = arith.constant 0 : index
    %3 = vector.load %arg4[%c0, %c0_1, %c0_2] : memref<1x8x16xf32, #tpu.memory_space<vmem>>, vector<1x8x16xf32>
    %4 = vector.shape_cast %3 : vector<1x8x16xf32> to vector<8x16xf32>
    %c0_3 = arith.constant 0 : index
    %c0_4 = arith.constant 0 : index
    %c0_5 = arith.constant 0 : index
    %5 = vector.load %arg5[%c0_3, %c0_4, %c0_5] : memref<1x8x16xf32, #tpu.memory_space<vmem>>, vector<1x8x16xf32>
    %6 = vector.shape_cast %5 : vector<1x8x16xf32> to vector<8x16xf32>
    %c0_6 = arith.constant 0 : index
    %c0_7 = arith.constant 0 : index
    %c0_8 = arith.constant 0 : index
    %7 = vector.load %arg6[%c0_6, %c0_7, %c0_8] : memref<1x8x128xf32, #tpu.memory_space<vmem>>, vector<1x8x128xf32>
    %8 = vector.shape_cast %7 : vector<1x8x128xf32> to vector<8x128xf32>
    %cst = arith.constant 2.500000e-01 : f32
    %9 = vector.broadcast %cst : f32 to vector<8x16xf32>
    %10 = arith.mulf %4, %9 : vector<8x16xf32>
    %cst_9 = arith.constant dense<0.000000e+00> : vector<8x8xf32>
    %11 = tpu.matmul %10, %6, %cst_9 {dimension_numbers = #tpu.dot_dimension_numbers<[1], [1], [0], [0], [0, 0, 1, 0], [], []>} : vector<8x16xf32>, vector<8x16xf32>, vector<8x8xf32> -> vector<8x8xf32>
    %12 = tpu.iota {dimensions = array<i32: 1>} : vector<8x8xi32>
    %c8_i32 = arith.constant 8 : i32
    %13 = arith.muli %arg2, %c8_i32 : i32
    %14 = vector.broadcast %13 : i32 to vector<8x8xi32>
    %15 = arith.addi %12, %14 : vector<8x8xi32>
    %16 = arith.index_cast %arg0 : i32 to index
    %17 = memref.load %arg3[%16] : memref<2xi32, #tpu.memory_space<smem>>
    %18 = vector.broadcast %17 : i32 to vector<8x8xi32>
    %19 = arith.cmpi slt, %15, %18 : vector<8x8xi32>
    %cst_10 = arith.constant -1.000000e+30 : f32
    %20 = vector.broadcast %cst_10 : f32 to vector<8x8xf32>
    %21 = arith.select %19, %11, %20 : vector<8x8xi1>, vector<8x8xf32>
    %c0_11 = arith.constant 0 : index
    %c0_12 = arith.constant 0 : index
    %22 = vector.load %arg8[%c0_11, %c0_12] : memref<8x1xf32, #tpu.memory_space<vmem>>, vector<8x1xf32>
    %cst_13 = arith.constant dense<0xFF800000> : vector<8xf32>
    %23 = vector.multi_reduction <maximumf>, %21, %cst_13 [1] : vector<8x8xf32> to vector<8xf32>
    %24 = vector.shape_cast %23 : vector<8xf32> to vector<8x1xf32>
    %25 = arith.maximumf %22, %24 : vector<8x1xf32>
    %26 = arith.subf %22, %25 : vector<8x1xf32>
    %27 = math.exp %26 : vector<8x1xf32>
    %28 = vector.broadcast %25 : vector<8x1xf32> to vector<8x8xf32>
    %29 = arith.subf %21, %28 : vector<8x8xf32>
    %30 = math.exp %29 : vector<8x8xf32>
    %c0_14 = arith.constant 0 : index
    %c0_15 = arith.constant 0 : index
    %31 = vector.load %arg9[%c0_14, %c0_15] : memref<8x1xf32, #tpu.memory_space<vmem>>, vector<8x1xf32>
    %32 = arith.mulf %27, %31 : vector<8x1xf32>
    %cst_16 = arith.constant dense<0.000000e+00> : vector<8xf32>
    %33 = vector.multi_reduction <add>, %30, %cst_16 [1] : vector<8x8xf32> to vector<8xf32>
    %34 = vector.shape_cast %33 : vector<8xf32> to vector<8x1xf32>
    %35 = arith.addf %32, %34 : vector<8x1xf32>
    %c0_17 = arith.constant 0 : index
    %c0_18 = arith.constant 0 : index
    %36 = vector.load %arg9[%c0_17, %c0_18] : memref<8x1xf32, #tpu.memory_space<vmem>>, vector<8x1xf32>
    tpu.vector_store %arg9[%c0_17, %c0_18], %35 {strides = array<i32>} : memref<8x1xf32, #tpu.memory_space<vmem>>, vector<8x1xf32>,
    %c0_19 = arith.constant 0 : index
    %c0_20 = arith.constant 0 : index
    %37 = vector.load %arg10[%c0_19, %c0_20] : memref<8x128xf32, #tpu.memory_space<vmem>>, vector<8x128xf32>
    %38 = vector.broadcast %27 : vector<8x1xf32> to vector<8x128xf32>
    %39 = arith.mulf %38, %37 : vector<8x128xf32>
    %cst_21 = arith.constant dense<0.000000e+00> : vector<8x128xf32>
    %40 = tpu.matmul %30, %8, %cst_21 {dimension_numbers = #tpu.dot_dimension_numbers<[1], [0], [0], [1], [0, 0, 1, 1], [], []>} : vector<8x8xf32>, vector<8x128xf32>, vector<8x128xf32> -> vector<8x128xf32>
    %41 = arith.addf %39, %40 : vector<8x128xf32>
    %c0_22 = arith.constant 0 : index
    %c0_23 = arith.constant 0 : index
    %42 = vector.load %arg10[%c0_22, %c0_23] : memref<8x128xf32, #tpu.memory_space<vmem>>, vector<8x128xf32>
    tpu.vector_store %arg10[%c0_22, %c0_23], %41 {strides = array<i32>} : memref<8x128xf32, #tpu.memory_space<vmem>>, vector<8x128xf32>,
    %c0_24 = arith.constant 0 : index
    %c0_25 = arith.constant 0 : index
    %43 = vector.load %arg8[%c0_24, %c0_25] : memref<8x1xf32, #tpu.memory_space<vmem>>, vector<8x1xf32>
    tpu.vector_store %arg8[%c0_24, %c0_25], %25 {strides = array<i32>} : memref<8x1xf32, #tpu.memory_space<vmem>>, vector<8x1xf32>,
    %c0_i32_26 = arith.constant 0 : i32
    %44 = arith.cmpi eq, %arg2, %c0_i32_26 : i32
    %45 = arith.extui %44 : i1 to i32
    %c0_i32_27 = arith.constant 0 : i32
    %46 = arith.cmpi ne, %45, %c0_i32_27 : i32
    scf.if %46 {
      %c0_28 = arith.constant 0 : index
      %c0_29 = arith.constant 0 : index
      %47 = vector.load %arg9[%c0_28, %c0_29] : memref<8x1xf32, #tpu.memory_space<vmem>>, vector<8x1xf32>
      %48 = tpu.reciprocal %47 {approx = true} : vector<8x1xf32> -> vector<8x1xf32>
      %c0_30 = arith.constant 0 : index
      %c0_31 = arith.constant 0 : index
      %49 = vector.load %arg10[%c0_30, %c0_31] : memref<8x128xf32, #tpu.memory_space<vmem>>, vector<8x128xf32>
      %50 = vector.broadcast %48 : vector<8x1xf32> to vector<8x128xf32>
      %51 = arith.mulf %49, %50 : vector<8x128xf32>
      %c0_32 = arith.constant 0 : index
      %c0_33 = arith.constant 0 : index
      %c0_34 = arith.constant 0 : index
      %52 = vector.load %arg7[%c0_32, %c0_33, %c0_34] : memref<1x8x128xf32, #tpu.memory_space<vmem>>, vector<1x8x128xf32>
      %53 = vector.shape_cast %52 : vector<1x8x128xf32> to vector<8x128xf32>
      %54 = vector.shape_cast %51 : vector<8x128xf32> to vector<1x8x128xf32>
      tpu.vector_store %arg7[%c0_32, %c0_33, %c0_34], %54 {strides = array<i32>} : memref<1x8x128xf32, #tpu.memory_space<vmem>>, vector<1x8x128xf32>,
    } else {
    }
    return
  }
  func.func @transform_0(%arg0: i32, %arg1: i32, %arg2: i32, %arg3: memref<2xi32, #tpu.memory_space<smem>>) -> (i32, i32, i32) {
    %c0_i32 = arith.constant 0 : i32
    %c0_i32_0 = arith.constant 0 : i32
    return %arg0, %arg1, %c0_i32 : i32, i32, i32
  }
  func.func @transform_1(%arg0: i32, %arg1: i32, %arg2: i32, %arg3: memref<2xi32, #tpu.memory_space<smem>>) -> (i32, i32, i32) {
    %c0_i32 = arith.constant 0 : i32
    %c0_i32_0 = arith.constant 0 : i32
    return %arg0, %arg2, %c0_i32 : i32, i32, i32
  }
  func.func @transform_2(%arg0: i32, %arg1: i32, %arg2: i32, %arg3: memref<2xi32, #tpu.memory_space<smem>>) -> (i32, i32, i32) {
    %c0_i32 = arith.constant 0 : i32
    %c0_i32_0 = arith.constant 0 : i32
    return %arg0, %arg2, %c0_i32 : i32, i32, i32
  }
  func.func @transform_3(%arg0: i32, %arg1: i32, %arg2: i32, %arg3: memref<2xi32, #tpu.memory_space<smem>>) -> (i32, i32, i32) {
    %c0_i32 = arith.constant 0 : i32
    %c0_i32_0 = arith.constant 0 : i32
    return %arg0, %arg1, %c0_i32 : i32, i32, i32
  }
}

</mosaic_0001>

<llo_original>
// kernel: tpu_custom_call.1
$region0: #{tpu_custom_call.1}
  #allocation0 [shape = 'u32[]', space=smem, size = 0x4, offset = 0x4, fixed_abs, tag = 'smem constant byte address 0x4 - core index']
  #allocation1 [shape = 'u32[144,128]{1,0:T(1,128)}', space=vmem, size = 0x12000, scoped, tag = 'internal scratch']
  #allocation2 [shape = 'f32[8,1]{1,0:T(8,128)}', space=vmem, size = 0x1000, scoped, tag = 'scratch operand']
  #allocation3 [shape = 'f32[8,1]{1,0:T(8,128)}', space=vmem, size = 0x1000, scoped, tag = 'scratch operand']
  #allocation4 [shape = 'f32[8,128]{1,0:T(8,128)}', space=vmem, size = 0x1000, scoped, tag = 'scratch operand']
  #allocation5 [shape = 's32[1]{0}', space=sflag, size = 0x4, scoped, tag = 'scoped memory for tpu_custom_call.1']
  #allocation6 [shape = 'u8[512]{0}', space=smem, size = 0x200, scoped, tag = 'prefetched SMEM operand 0']
  %s0 = inlined_call_operand.hbm [shape: s32[2], index: 0, kind: input, shape index: {}]
  %s1 = inlined_call_operand.hbm [shape: f32[2,8,16], index: 1, kind: input, shape index: {}]
  %s2 = inlined_call_operand.hbm [shape: f32[2,8,16], index: 2, kind: input, shape index: {}]
  %s3 = inlined_call_operand.hbm [shape: f32[2,8,128], index: 3, kind: input, shape index: {}]
  %s4 = inlined_call_operand.hbm [shape: f32[2,8,128], index: 4, kind: output, shape index: {}]
  %s5 = sld [smem:[#allocation0]]
  $region65: #{tpu_custom_call.1} parent=0
    _
  %s7 = ssub.s32 1, %s5
  %s8 = scalar_select 0, %s7, %s5
  %10 = dma.hbm_to_smem %s0, 16, [#allocation6], [#allocation5]
  %11 = dma.done [#allocation5], 16
  %12 = sfence
  $region1: #{tpu_custom_call.1} parent=0
    #allocation7 [shape = 'u8[8192]{0}', space=vmem, size = 0x2000, scoped, tag = 'input window, operand 1']
    #allocation8 [shape = 's32[2]{0}', space=sflag, size = 0x8, scoped, tag = 'scoped memory for tpu_custom_call.1']
    #allocation9 [shape = 's32[2]{0}', space=sflag, size = 0x8, scoped, tag = 'scoped memory for tpu_custom_call.1']
    #allocation10 [shape = 'u8[8192]{0}', space=vmem, size = 0x2000, scoped, tag = 'input window, operand 2']
    #allocation11 [shape = 's32[2]{0}', space=sflag, size = 0x8, scoped, tag = 'scoped memory for tpu_custom_call.1']
    #allocation12 [shape = 'u8[8192]{0}', space=vmem, size = 0x2000, scoped, tag = 'input window, operand 3']
    #allocation13 [shape = 'u8[8192]{0}', space=vmem, size = 0x2000, scoped, tag = 'output window, operand 0']
    %13 = vsyncpa [#allocation8], 0
    %s14 = scalar_lea.sflag [#allocation8], 1
    %15 = vsyncpa %s14, 0
    %16 = vsyncpa [#allocation11], 0
    %s17 = scalar_lea.sflag [#allocation11], 1
    %18 = vsyncpa %s17, 0
    %19 = vsyncpa [#allocation9], 0
    %s20 = scalar_lea.sflag [#allocation9], 1
    %21 = vsyncpa %s20, 0
    loop: start=0, step=1, limit=4
    $region2: #{tpu_custom_call.1} parent=1 // loop_pre_header
      _
    $region3: #{tpu_custom_call.1} parent=1 // loop_header
      %s23 = sphi 0, %s27
      %p24 = scmp.ge.s32.totalorder %s23, 4
      %s30 = sphi 0, %s49
      %s31 = sphi 0, %s45
      %s32 = sphi 0, %s41
      %s33 = sphi 0, %s30
      %s34 = sphi 0, %s31
      %s35 = sphi 0, %s32
      %s36 = sphi 0, %s33
      %s37 = sphi 0, %s34
      %s38 = sphi 0, %s35
      %s54 = sphi 0, %s56
      %s57 = sphi 0, %s54
      %s58 = sphi 0, %s57
      %s74 = sphi 0, %s58
      %s82 = sphi 0, %s84
      %s85 = sphi 0, %s82
      %s86 = sphi 0, %s85
      %s102 = sphi 0, %s86
      %s110 = sphi 0, %s112
      %s113 = sphi 0, %s110
      %s114 = sphi 0, %s113
      %s130 = sphi 0, %s114
      %s138 = sphi 0, %s140
      %s141 = sphi 0, %s138
      %s142 = sphi 0, %s141
      %s158 = sphi 0, %s142
    $region4: #{tpu_custom_call.1} parent=1 // loop_header_branch
      %26 = sbr.rel (%p24) target = $region8
    $region5: #{tpu_custom_call.1} parent=1 // loop_body
      %s28 = ssub.s32 %s23, 1
      %s29 = ssub.s32 %s23, 2
      %s39 = sadd.s32 1, %s32
      %p40 = scmp.ge.s32.totalorder %s39, 1
      %s41 = scalar_select %p40, 0, %s39
      %s42 = sadd.s32 1, %s31
      %s43 = scalar_select %p40, %s42, %s31
      %p44 = scmp.ge.s32.totalorder %s43, 1
      %s45 = scalar_select %p44, 0, %s43
      %s46 = sadd.s32 1, %s30
      %s47 = scalar_select %p44, %s46, %s30
      %p48 = scmp.ge.s32.totalorder %s47, 2
      %s49 = scalar_select %p48, 0, %s47
      %s50 = ssub.s32 %s30, %s49
      %s51 = ssub.s32 %s31, %s45
      %s52 = sor.u32 %s50, %s51
      %p53 = scmp.eq.s32.totalorder %s52, 0
      %s55 = sadd.s32 %s54, 1
      %s56 = scalar_select %p53, %s54, %s55
      %p59 = pneg %p53
      %p60 = scmp.eq.s32.totalorder %s23, 1
      %p61 = por %p59, %p60
      %p62 = scmp.ne.s32.totalorder %s54, %s57
      %p63 = scmp.eq.s32.totalorder %s23, 0
      %p64 = por %p62, %p63
      %p65 = scmp.ne.s32.totalorder %s54, %s57
      %p66 = scmp.eq.s32.totalorder %s28, 1
      %p67 = por %p65, %p66
      %p68 = scmp.ne.s32.totalorder %s57, %s58
      %p69 = scmp.eq.s32.totalorder %s28, 0
      %p70 = por %p68, %p69
      %p71 = scmp.ne.s32.totalorder %s57, %s58
      %p72 = scmp.eq.s32.totalorder %s29, 1
      %p73 = por %p71, %p72
      %p75 = scmp.ne.s32.totalorder %s58, %s74
      %p76 = scmp.eq.s32.totalorder %s29, 0
      %p77 = por %p75, %p76
      %s78 = ssub.s32 %s30, %s49
      %s79 = ssub.s32 %s32, %s41
      %s80 = sor.u32 %s78, %s79
      %p81 = scmp.eq.s32.totalorder %s80, 0
      %s83 = sadd.s32 %s82, 1
      %s84 = scalar_select %p81, %s82, %s83
      %p87 = pneg %p81
      %p88 = scmp.eq.s32.totalorder %s23, 1
      %p89 = por %p87, %p88
      %p90 = scmp.ne.s32.totalorder %s82, %s85
      %p91 = scmp.eq.s32.totalorder %s23, 0
      %p92 = por %p90, %p91
      %p93 = scmp.ne.s32.totalorder %s82, %s85
      %p94 = scmp.eq.s32.totalorder %s28, 1
      %p95 = por %p93, %p94
      %p96 = scmp.ne.s32.totalorder %s85, %s86
      %p97 = scmp.eq.s32.totalorder %s28, 0
      %p98 = por %p96, %p97
      %p99 = scmp.ne.s32.totalorder %s85, %s86
      %p100 = scmp.eq.s32.totalorder %s29, 1
      %p101 = por %p99, %p100
      %p103 = scmp.ne.s32.totalorder %s86, %s102
      %p104 = scmp.eq.s32.totalorder %s29, 0
      %p105 = por %p103, %p104
      %s106 = ssub.s32 %s30, %s49
      %s107 = ssub.s32 %s32, %s41
      %s108 = sor.u32 %s106, %s107
      %p109 = scmp.eq.s32.totalorder %s108, 0
      %s111 = sadd.s32 %s110, 1
      %s112 = scalar_select %p109, %s110, %s111
      %p115 = pneg %p109
      %p116 = scmp.eq.s32.totalorder %s23, 1
      %p117 = por %p115, %p116
      %p118 = scmp.ne.s32.totalorder %s110, %s113
      %p119 = scmp.eq.s32.totalorder %s23, 0
      %p120 = por %p118, %p119
      %p121 = scmp.ne.s32.totalorder %s110, %s113
      %p122 = scmp.eq.s32.totalorder %s28, 1
      %p123 = por %p121, %p122
      %p124 = scmp.ne.s32.totalorder %s113, %s114
      %p125 = scmp.eq.s32.totalorder %s28, 0
      %p126 = por %p124, %p125
      %p127 = scmp.ne.s32.totalorder %s113, %s114
      %p128 = scmp.eq.s32.totalorder %s29, 1
      %p129 = por %p127, %p128
      %p131 = scmp.ne.s32.totalorder %s114, %s130
      %p132 = scmp.eq.s32.totalorder %s29, 0
      %p133 = por %p131, %p132
      %s134 = ssub.s32 %s30, %s49
      %s135 = ssub.s32 %s31, %s45
      %s136 = sor.u32 %s134, %s135
      %p137 = scmp.eq.s32.totalorder %s136, 0
      %s139 = sadd.s32 %s138, 1
      %s140 = scalar_select %p137, %s138, %s139
      %p143 = pneg %p137
      %p144 = scmp.eq.s32.totalorder %s23, 1
      %p145 = por %p143, %p144
      %p146 = scmp.ne.s32.totalorder %s138, %s141
      %p147 = scmp.eq.s32.totalorder %s23, 0
      %p148 = por %p146, %p147
      %p149 = scmp.ne.s32.totalorder %s138, %s141
      %p150 = scmp.eq.s32.totalorder %s28, 1
      %p151 = por %p149, %p150
      %p152 = scmp.ne.s32.totalorder %s141, %s142
      %p153 = scmp.eq.s32.totalorder %s28, 0
      %p154 = por %p152, %p153
      %p155 = scmp.ne.s32.totalorder %s141, %s142
      %p156 = scmp.eq.s32.totalorder %s29, 1
      %p157 = por %p155, %p156
      %p159 = scmp.ne.s32.totalorder %s142, %s158
      %p160 = scmp.eq.s32.totalorder %s29, 0
      %p161 = por %p159, %p160
      %p162 = scmp.le.s32.totalorder 1, %s23
      %p163 = scmp.lt.s32.totalorder %s23, 3
      %p164 = pnand %p162, %p163
      %p165 = pneg %p164
      // Predicated region
      $region9: #{tpu_custom_call.1} parent=5 // pred_check
        _
      $region10: #{tpu_custom_call.1} parent=5 // pred_check_branch
        %167 = sbr.rel (%p164) target = $region12
      $region11: #{tpu_custom_call.1} parent=5 // pred_region
        %s168 = ssub.s32 %s23, 1
      $region12: #{tpu_custom_call.1} parent=5 // pred_fallthru
        _
      %p169 = scmp.lt.s32.totalorder %s23, 2
      // Predicated region
      $region13: #{tpu_custom_call.1} parent=5 // pred_check
        %p170 = pneg %p169
      $region14: #{tpu_custom_call.1} parent=5 // pred_check_branch
        %172 = sbr.rel (%p170) target = $region16
      $region15: #{tpu_custom_call.1} parent=5 // pred_region
        // Predicated region
        $region17: #{tpu_custom_call.1} parent=15 // pred_check
          %p173 = pneg %p64
        $region18: #{tpu_custom_call.1} parent=15 // pred_check_branch
          %175 = sbr.rel (%p173) target = $region20
        $region19: #{tpu_custom_call.1} parent=15 // pred_region
          %s176 = sand.u32 %s54, 1
          %s177 = scalar_lea.sflag [#allocation8], %s176
          %s178 = sand.u32 %s54, 1
          %s179 = smul.addr %s178, 8
          %s180 = scalar_lea.vmem [#allocation7], %s179
          %s182 = ssub.s32 128, 128
          %183 = vsyncadd %s177, %s182
          %s184 = sadd.s32 %s31, %s30
          %s185 = smul.addr %s184, 128
          %s186 = scalar_lea.hbm %s1, %s185
          %s188 = sshll.u32 %s180, 4
          %s189 = int_to_ptr.vmem [resolvable:$true] %s188
          %191 = dma.hbm_to_vmem [thread:$0]  %s186, 128, %s189, %s177
        $region20: #{tpu_custom_call.1} parent=15 // pred_fallthru
          _
        // Predicated region
        $region21: #{tpu_custom_call.1} parent=15 // pred_check
          %p192 = pneg %p92
        $region22: #{tpu_custom_call.1} parent=15 // pred_check_branch
          %194 = sbr.rel (%p192) target = $region24
        $region23: #{tpu_custom_call.1} parent=15 // pred_region
          %s195 = sand.u32 %s23, 1
          %s196 = scalar_lea.sflag [#allocation11], %s195
          %s197 = sand.u32 %s82, 1
          %s198 = smul.addr %s197, 8
          %s199 = scalar_lea.vmem [#allocation10], %s198
          %s201 = ssub.s32 128, 128
          %202 = vsyncadd %s196, %s201
          %s203 = sadd.s32 %s32, %s30
          %s204 = smul.addr %s203, 128
          %s205 = scalar_lea.hbm %s2, %s204
          %s207 = sshll.u32 %s199, 4
          %s208 = int_to_ptr.vmem [resolvable:$true] %s207
          %210 = dma.hbm_to_vmem [thread:$0]  %s205, 128, %s208, %s196
        $region24: #{tpu_custom_call.1} parent=15 // pred_fallthru
          _
        // Predicated region
        $region25: #{tpu_custom_call.1} parent=15 // pred_check
          %p211 = pneg %p120
        $region26: #{tpu_custom_call.1} parent=15 // pred_check_branch
          %213 = sbr.rel (%p211) target = $region28
        $region27: #{tpu_custom_call.1} parent=15 // pred_region
          %s214 = sand.u32 %s23, 1
          %s215 = scalar_lea.sflag [#allocation11], %s214
          %s216 = sand.u32 %s110, 1
          %s217 = smul.addr %s216, 8
          %s218 = scalar_lea.vmem [#allocation12], %s217
          %s220 = ssub.s32 128, 128
          %221 = vsyncadd %s215, %s220
          %s222 = sadd.s32 %s32, %s30
          %s223 = smul.addr %s222, 128
          %s224 = scalar_lea.hbm %s3, %s223
          %s226 = sshll.u32 %s218, 4
          %s227 = int_to_ptr.vmem [resolvable:$true] %s226
          %229 = dma.hbm_to_vmem [thread:$0]  %s224, 128, %s227, %s215
        $region28: #{tpu_custom_call.1} parent=15 // pred_fallthru
          _
      $region16: #{tpu_custom_call.1} parent=5 // pred_fallthru
        _
      %p230 = scmp.le.s32.totalorder 1, %s23
      %p231 = scmp.lt.s32.totalorder %s23, 3
      %p232 = pnand %p230, %p231
      %p233 = pneg %p232
      // Predicated region
      $region29: #{tpu_custom_call.1} parent=5 // pred_check
        _
      $region30: #{tpu_custom_call.1} parent=5 // pred_check_branch
        %235 = sbr.rel (%p232) target = $region32
      $region31: #{tpu_custom_call.1} parent=5 // pred_region
        %s236 = ssub.s32 %s23, 1
        %s237 = sand.u32 %s57, 1
        %s238 = scalar_lea.sflag [#allocation8], %s237
        %s239 = sand.u32 %s57, 1
        %s240 = smul.addr %s239, 8
        %s241 = scalar_lea.vmem [#allocation7], %s240
        // Predicated region
        $region33: #{tpu_custom_call.1} parent=31 // pred_check
          %p242 = pneg %p70
        $region34: #{tpu_custom_call.1} parent=31 // pred_check_branch
          %244 = sbr.rel (%p242) target = $region36
        $region35: #{tpu_custom_call.1} parent=31 // pred_region
          %245 = dma.done %s238, 128
        $region36: #{tpu_custom_call.1} parent=31 // pred_fallthru
          _
        %s246 = sand.u32 %s28, 1
        %s247 = scalar_lea.sflag [#allocation11], %s246
        %s248 = sand.u32 %s85, 1
        %s249 = smul.addr %s248, 8
        %s250 = scalar_lea.vmem [#allocation10], %s249
        // Predicated region
        $region37: #{tpu_custom_call.1} parent=31 // pred_check
          %p251 = pneg %p98
        $region38: #{tpu_custom_call.1} parent=31 // pred_check_branch
          %253 = sbr.rel (%p251) target = $region40
        $region39: #{tpu_custom_call.1} parent=31 // pred_region
          %254 = dma.done %s247, 128
        $region40: #{tpu_custom_call.1} parent=31 // pred_fallthru
          _
        %s255 = sand.u32 %s28, 1
        %s256 = scalar_lea.sflag [#allocation11], %s255
        %s257 = sand.u32 %s113, 1
        %s258 = smul.addr %s257, 8
        %s259 = scalar_lea.vmem [#allocation12], %s258
        // Predicated region
        $region41: #{tpu_custom_call.1} parent=31 // pred_check
          %p260 = pneg %p126
        $region42: #{tpu_custom_call.1} parent=31 // pred_check_branch
          %262 = sbr.rel (%p260) target = $region44
        $region43: #{tpu_custom_call.1} parent=31 // pred_region
          %263 = dma.done %s256, 128
        $region44: #{tpu_custom_call.1} parent=31 // pred_fallthru
          _
        %s264 = sand.u32 %s57, 1
        %s265 = scalar_lea.sflag [#allocation8], %s264
        %s266 = sand.u32 %s57, 1
        %s267 = smul.addr %s266, 8
        %s268 = scalar_lea.vmem [#allocation7], %s267
        %p269 = pneg %p70
        %p270 = pneg %p67
        %s271 = sand.u32 %s28, 1
        %s272 = scalar_lea.sflag [#allocation11], %s271
        %s273 = sand.u32 %s85, 1
        %s274 = smul.addr %s273, 8
        %s275 = scalar_lea.vmem [#allocation10], %s274
        %p276 = pneg %p98
        %p277 = pneg %p95
        %s278 = sand.u32 %s28, 1
        %s279 = scalar_lea.sflag [#allocation11], %s278
        %s280 = sand.u32 %s113, 1
        %s281 = smul.addr %s280, 8
        %s282 = scalar_lea.vmem [#allocation12], %s281
        %p283 = pneg %p126
        %p284 = pneg %p123
        %p285 = pneg %p154
        %p286 = pneg %p151
        %s287 = sand.u32 %s141, 1
        %s288 = scalar_lea.sflag [#allocation9], %s287
        %s289 = sand.u32 %s141, 1
        %s290 = smul.addr %s289, 8
        %s291 = scalar_lea.vmem [#allocation13], %s290
        %p292 = scmp.eq.s32.totalorder %s35, 0
        // Predicated region
        $region45: #{tpu_custom_call.1} parent=31 // pred_check
          %p293 = pneg %p292
        $region46: #{tpu_custom_call.1} parent=31 // pred_check_branch
          %295 = sbr.rel (%p293) target = $region48
        $region47: #{tpu_custom_call.1} parent=31 // pred_region
          %vm296 = vcmask 7168
          %297 = vst.msk [vmem:[#allocation2] sm:$0xff] %vm296, -inf
          %298 = vst.msk [vmem:[#allocation3] sm:$0xff] %vm296, 0.0
          %299 = vst [vmem:[#allocation4] sm:$0xff] 0.0
        $region48: #{tpu_custom_call.1} parent=31 // pred_fallthru
          _
        %v300 = vld [vmem:[%s241] sm:$0xff]
        %v301 = vld [vmem:[%s250] sm:$0xff]
        %v302 = vld [vmem:[%s259] sm:$0xff]
        %v303 = vmul.f32 %v300, 0.25
        %vm304 = vcmask 130048
        %v306 = vsel %vm304, %v303, 0
        %v309 = vsel %vm304, %v301, 0
        %311 = vmatprep.subr.mxu0 0.0
        %312 = vmatpush1.xpose.msra.mxu0 %v309
        %313 = vmatprep.subr.mxu0 0.0
        %314 = vmatpush1.xpose.msra.mxu0 0.0
        %315 = vmatprep.subr.mxu0 0.0
        %316 = vmatpush1.xpose.msra.mxu0 0.0
        %317 = vmatprep.subr.mxu0 0.0
        %318 = vmatpush1.xpose.msra.mxu0 0.0
        %319 = vmatprep.subr.mxu0 0.0
        %320 = vmatpush1.xpose.msra.mxu0 0.0
        %321 = vmatprep.subr.mxu0 0.0
        %322 = vmatpush1.xpose.msra.mxu0 0.0
        %323 = vmatprep.subr.mxu0 0.0
        %324 = vmatpush1.xpose.msra.mxu0 0.0
        %325 = vmatprep.subr.mxu0 0.0
        %326 = vmatpush1.xpose.msra.mxu0 0.0
        %327 = vmatprep.subr.mxu0 0.0
        %328 = vmatpush1.xpose.msra.mxu0 0.0
        %329 = vmatprep.subr.mxu0 0.0
        %330 = vmatpush1.xpose.msra.mxu0 0.0
        %331 = vmatprep.subr.mxu0 0.0
        %332 = vmatpush1.xpose.msra.mxu0 0.0
        %333 = vmatprep.subr.mxu0 0.0
        %334 = vmatpush1.xpose.msra.mxu0 0.0
        %335 = vmatprep.subr.mxu0 0.0
        %336 = vmatpush1.xpose.msra.mxu0 0.0
        %337 = vmatprep.subr.mxu0 0.0
        %338 = vmatpush1.xpose.msra.mxu0 0.0
        %339 = vmatprep.subr.mxu0 0.0
        %340 = vmatpush1.xpose.msra.mxu0 0.0
        %341 = vmatprep.subr.mxu0 0.0
        %342 = vmatpush1.xpose.msra.mxu0 0.0
        %343 = vmatprep.subr.mxu0 0.0
        %344 = vmatpush1.xpose.msra.mxu0 0.0
        %345 = vmatprep.subr.mxu0 0.0
        %346 = vmatpush1.xpose.msra.mxu0 0.0
        %347 = vmatprep.subr.mxu0 0.0
        %348 = vmatpush1.xpose.msra.mxu0 0.0
        %349 = vmatprep.subr.mxu0 0.0
        %350 = vmatpush1.xpose.msra.mxu0 0.0
        %351 = vmatprep.subr.mxu0 0.0
        %352 = vmatpush1.xpose.msra.mxu0 0.0
        %353 = vmatprep.subr.mxu0 0.0
        %354 = vmatpush1.xpose.msra.mxu0 0.0
        %355 = vmatprep.subr.mxu0 0.0
        %356 = vmatpush1.xpose.msra.mxu0 0.0
        %357 = vmatprep.subr.mxu0 0.0
        %358 = vmatpush1.xpose.msra.mxu0 0.0
        %359 = vmatprep.subr.mxu0 0.0
        %360 = vmatpush1.xpose.msra.mxu0 0.0
        %361 = vmatprep.subr.mxu0 0.0
        %362 = vmatpush1.xpose.msra.mxu0 0.0
        %363 = vmatprep.subr.mxu0 0.0
        %364 = vmatpush1.xpose.msra.mxu0 0.0
        %365 = vmatprep.subr.mxu0 0.0
        %366 = vmatpush1.xpose.msra.mxu0 0.0
        %367 = vmatprep.subr.mxu0 0.0
        %368 = vmatpush1.xpose.msra.mxu0 0.0
        %369 = vmatprep.subr.mxu0 0.0
        %370 = vmatpush1.xpose.msra.mxu0 0.0
        %371 = vmatprep.subr.mxu0 0.0
        %372 = vmatpush1.xpose.msra.mxu0 0.0
        %373 = vmatprep.subr.mxu0 0.0
        %374 = vmatpush1.xpose.msra.mxu0 0.0
        %375 = vmatprep.mubr.f32.mxu0 0.0
        %376 = vmatmul.mubr.f32.gmra.mrb[0].mxu0 %v306
        %v377 = vpop.f32.mrb[0].mxu0
        %v378 = vadd.f32 0.0, %v377
        %v379 = vpop.f32.mrb[0].mxu0
        %380 = vdwg.mxu0
        %v381 = vlaneseq
        %v382 = vand.u32 %v381, 127
        %s383 = smul.u32 %s35, 8
        %v384 = vstv %s383
        %v385 = vadd.s32 %v382, %v384
        %s386 = sld [smem:[#allocation6 + %s33]]
        %v387 = vstv %s386
        %vm388 = vcmp.lt.s32.totalorder %v385, %v387
        %v389 = vsel %vm388, %v378, -1e+30
        %v390 = vld [vmem:[#allocation2] sm:$0xff]
        %vm391 = vcmask 64512
        %v392 = vsel %vm391, %v389, -inf
        %393 = vmax.xlane.f32.xlu0 %v392
        %v394 = vpop.xlane.xlu0 %393
        %v395 = vmax.f32 %v390, %v394
        %v396 = vsub.f32 %v390, %v395
        %v397 = vmul.f32 %v396, 1.442695
        %v398 = vpow.pop %v397
        %400 = vset.pattern.permute.xlu0 0
        %401 = vperm.xlu0 %400, %v395
        %v402 = vpop.permute.xlu0 %401
        %v404 = vsub.f32 %v389, %v402
        %v405 = vmul.f32 %v404, 1.442695
        %v406 = vpow.pop %v405
        %v407 = vld [vmem:[#allocation3] sm:$0xff]
        %v408 = vmul.f32 %v398, %v407
        %v409 = vsel %vm391, %v406, 0.0
        %410 = vadd.xlane.f32.xlu0 %v409
        %v411 = vpop.xlane.xlu0 %410
        %v412 = vadd.f32 %v408, %v411
        %vm413 = vcmask 7168
        %414 = vst.msk [vmem:[#allocation3] sm:$0xff] %vm413, %v412
        %v415 = vld [vmem:[#allocation4] sm:$0xff]
        %417 = vset.pattern.permute.xlu0 0
        %418 = vperm.xlu0 %417, %v398
        %v419 = vpop.permute.xlu0 %418
        %v421 = vmul.f32 %v419, %v415
        %v423 = vsel %vm391, %v406, 0
        %425 = vmatprep.subr.mxu0 0.0
        %426 = vmatpush1.msra.mxu0 %v302
        %427 = vmatprep.subr.mxu0 0.0
        %428 = vmatpush1.msra.mxu0 0.0
        %429 = vmatprep.subr.mxu0 0.0
        %430 = vmatpush1.msra.mxu0 0.0
        %431 = vmatprep.subr.mxu0 0.0
        %432 = vmatpush1.msra.mxu0 0.0
        %433 = vmatprep.subr.mxu0 0.0
        %434 = vmatpush1.msra.mxu0 0.0
        %435 = vmatprep.subr.mxu0 0.0
        %436 = vmatpush1.msra.mxu0 0.0
        %437 = vmatprep.subr.mxu0 0.0
        %438 = vmatpush1.msra.mxu0 0.0
        %439 = vmatprep.subr.mxu0 0.0
        %440 = vmatpush1.msra.mxu0 0.0
        %441 = vmatprep.subr.mxu0 0.0
        %442 = vmatpush1.msra.mxu0 0.0
        %443 = vmatprep.subr.mxu0 0.0
        %444 = vmatpush1.msra.mxu0 0.0
        %445 = vmatprep.subr.mxu0 0.0
        %446 = vmatpush1.msra.mxu0 0.0
        %447 = vmatprep.subr.mxu0 0.0
        %448 = vmatpush1.msra.mxu0 0.0
        %449 = vmatprep.subr.mxu0 0.0
        %450 = vmatpush1.msra.mxu0 0.0
        %451 = vmatprep.subr.mxu0 0.0
        %452 = vmatpush1.msra.mxu0 0.0
        %453 = vmatprep.subr.mxu0 0.0
        %454 = vmatpush1.msra.mxu0 0.0
        %455 = vmatprep.subr.mxu0 0.0
        %456 = vmatpush1.msra.mxu0 0.0
        %457 = vmatprep.subr.mxu0 0.0
        %458 = vmatpush1.msra.mxu0 0.0
        %459 = vmatprep.subr.mxu0 0.0
        %460 = vmatpush1.msra.mxu0 0.0
        %461 = vmatprep.subr.mxu0 0.0
        %462 = vmatpush1.msra.mxu0 0.0
        %463 = vmatprep.subr.mxu0 0.0
        %464 = vmatpush1.msra.mxu0 0.0
        %465 = vmatprep.subr.mxu0 0.0
        %466 = vmatpush1.msra.mxu0 0.0
        %467 = vmatprep.subr.mxu0 0.0
        %468 = vmatpush1.msra.mxu0 0.0
        %469 = vmatprep.subr.mxu0 0.0
        %470 = vmatpush1.msra.mxu0 0.0
        %471 = vmatprep.subr.mxu0 0.0
        %472 = vmatpush1.msra.mxu0 0.0
        %473 = vmatprep.subr.mxu0 0.0
        %474 = vmatpush1.msra.mxu0 0.0
        %475 = vmatprep.subr.mxu0 0.0
        %476 = vmatpush1.msra.mxu0 0.0
        %477 = vmatprep.subr.mxu0 0.0
        %478 = vmatpush1.msra.mxu0 0.0
        %479 = vmatprep.subr.mxu0 0.0
        %480 = vmatpush1.msra.mxu0 0.0
        %481 = vmatprep.subr.mxu0 0.0
        %482 = vmatpush1.msra.mxu0 0.0
        %483 = vmatprep.subr.mxu0 0.0
        %484 = vmatpush1.msra.mxu0 0.0
        %485 = vmatprep.subr.mxu0 0.0
        %486 = vmatpush1.msra.mxu0 0.0
        %487 = vmatprep.subr.mxu0 0.0
        %488 = vmatpush1.msra.mxu0 0.0
        %489 = vmatprep.mubr.f32.mxu0 0.0
        %490 = vmatmul.mubr.f32.gmra.mrb[0].mxu0 %v423
        %v491 = vpop.f32.mrb[0].mxu0
        %v492 = vadd.f32 0.0, %v491
        %v493 = vpop.f32.mrb[0].mxu0
        %494 = vdwg.mxu0
        %v495 = vadd.f32 %v421, %v492
        %496 = vst [vmem:[#allocation4] sm:$0xff] %v495
        %497 = vst.msk [vmem:[#allocation2] sm:$0xff] %vm413, %v395
        // Predicated region
        $region49: #{tpu_custom_call.1} parent=31 // pred_check
          %p498 = pneg %p292
        $region50: #{tpu_custom_call.1} parent=31 // pred_check_branch
          %500 = sbr.rel (%p498) target = $region52
        $region51: #{tpu_custom_call.1} parent=31 // pred_region
          %v501 = vld [vmem:[#allocation3] sm:$0xff]
          %v502 = vrcp.pop %v501
          %v503 = vld [vmem:[#allocation4] sm:$0xff]
          %505 = vset.pattern.permute.xlu0 0
          %506 = vperm.xlu0 %505, %v502
          %v507 = vpop.permute.xlu0 %506
          %v509 = vmul.f32 %v503, %v507
          %510 = vst [vmem:[%s291] sm:$0xff] %v509
        $region52: #{tpu_custom_call.1} parent=31 // pred_fallthru
          _
        %s511 = sand.u32 %s141, 1
        %s512 = scalar_lea.sflag [#allocation9], %s511
        %s513 = sand.u32 %s141, 1
        %s514 = smul.addr %s513, 8
        %s515 = scalar_lea.vmem [#allocation13], %s514
        // Predicated region
        $region53: #{tpu_custom_call.1} parent=31 // pred_check
          %p516 = pneg %p151
        $region54: #{tpu_custom_call.1} parent=31 // pred_check_branch
          %518 = sbr.rel (%p516) target = $region56
        $region55: #{tpu_custom_call.1} parent=31 // pred_region
          %s520 = ssub.s32 128, 128
          %521 = vsyncadd %s512, %s520
          %s522 = sadd.s32 %s34, %s33
          %s523 = smul.addr %s522, 128
          %s524 = scalar_lea.hbm %s4, %s523
          %s526 = sshll.u32 %s515, 4
          %s527 = int_to_ptr.vmem [resolvable:$true] %s526
          %529 = dma.vmem_to_hbm [thread:$0]  %s527, 128, %s524, %s512
        $region56: #{tpu_custom_call.1} parent=31 // pred_fallthru
          _
      $region32: #{tpu_custom_call.1} parent=5 // pred_fallthru
        _
      %p530 = scmp.le.s32.totalorder 2, %s23
      // Predicated region
      $region57: #{tpu_custom_call.1} parent=5 // pred_check
        %p531 = pneg %p530
      $region58: #{tpu_custom_call.1} parent=5 // pred_check_branch
        %533 = sbr.rel (%p531) target = $region60
      $region59: #{tpu_custom_call.1} parent=5 // pred_region
        %s534 = ssub.s32 %s23, 2
        // Predicated region
        $region61: #{tpu_custom_call.1} parent=59 // pred_check
          %p535 = pneg %p157
        $region62: #{tpu_custom_call.1} parent=59 // pred_check_branch
          %537 = sbr.rel (%p535) target = $region64
        $region63: #{tpu_custom_call.1} parent=59 // pred_region
          %s538 = sand.u32 %s142, 1
          %s539 = scalar_lea.sflag [#allocation9], %s538
          %s540 = sand.u32 %s142, 1
          %s541 = smul.addr %s540, 8
          %s542 = scalar_lea.vmem [#allocation13], %s541
          %543 = dma.done %s539, 128
        $region64: #{tpu_custom_call.1} parent=59 // pred_fallthru
          _
      $region60: #{tpu_custom_call.1} parent=5 // pred_fallthru
        _
    $region6: #{tpu_custom_call.1} parent=1 // loop_footer
      %s27 = sadd.s32 1, %s23
    $region7: #{tpu_custom_call.1} parent=1 // loop_footer_branch
      %22 = sbr.rel target = $region3
    $region8: #{tpu_custom_call.1} parent=1 // loop_exit
      _
    %544 = vsyncpa [#allocation8], 1
    %s545 = scalar_lea.sflag [#allocation8], 1
    %546 = vsyncpa %s545, 1
    %547 = vsyncpa [#allocation11], 1
    %s548 = scalar_lea.sflag [#allocation11], 1
    %549 = vsyncpa %s548, 1
    %550 = vsyncpa [#allocation9], 1
    %s551 = scalar_lea.sflag [#allocation9], 1
    %552 = vsyncpa %s551, 1

</llo_original>
